<compile_context>
chip_gen: v7x
topology: tpu7x:2x2x1
jax: 0.10.0
libtpu: 0.0.40
codegen_flags: <defaults>
</compile_context>

<pallas_src>
import jax
import jax.numpy as jnp
from jax.experimental import pallas as pl
from jax.experimental.pallas import tpu as pltpu

HID1 = 512     # 400 padded to lane multiple
HID2 = 384     # 300 padded to lane multiple
W3_ROWS = 8    # w3 stored as an (8, HID2) row block; only row 0 is real


def critic_kernel(x_ref, w1_ref, b1_ref, w2_ref, b2_ref, w3_ref, b3_ref, o_ref):
    # x : (tb, obs+act) bf16
    # w1: (obs+act, 512) bf16, b1: (1, 512) f32
    # w2: (512, 384) bf16,     b2: (1, 384) f32
    # w3: (8, 384) bf16 (row 0 = real weights), b3: (1, 1) f32 in SMEM
    # o : (1, tb) f32  -- lane-dense over batch
    h1 = (jnp.dot(x_ref[...], w1_ref[...], preferred_element_type=jnp.float32)
          + b1_ref[...])
    h1 = jnp.maximum(h1, 0.0).astype(jnp.bfloat16)

    h2 = jnp.dot(h1, w2_ref[...], preferred_element_type=jnp.float32) + b2_ref[...]
    h2 = jnp.maximum(h2, 0.0).astype(jnp.bfloat16)

    # Layer 3: contract the 384-wide hidden dim with the batch operand
    # transposed (NT dot), so the result is (8, tb) -- already laid out
    # lane-dense over batch.  Only row 0 carries real data.
    q8 = jax.lax.dot_general(
        w3_ref[...], h2, (((1,), (1,)), ((), ())),
        preferred_element_type=jnp.float32)          # (8, tb)
    o_ref[...] = (q8[0:1, :] + b3_ref[0, 0]).astype(o_ref.dtype)


def prepare_params(params):
    """Pad to lane-aligned widths, cast weights to bf16, reshape w3/b3."""
    w1, b1, w2, b2, w3, b3 = params                      # math layout (in, out)
    w1p = jnp.pad(w1, ((0, 0), (0, HID1 - w1.shape[1])))                 # (in, 512)
    b1p = jnp.pad(b1, ((0, 0), (0, HID1 - b1.shape[1])))                 # (1, 512)
    w2p = jnp.pad(w2, ((0, HID1 - w2.shape[0]), (0, HID2 - w2.shape[1])))  # (512, 384)
    b2p = jnp.pad(b2, ((0, 0), (0, HID2 - b2.shape[1])))                 # (1, 384)
    # w3: (300, 1) -> row vector (1, 300) -> padded to (8, 384); rows 1..7 zero.
    w3r = jnp.pad(w3.T, ((0, W3_ROWS - 1), (0, HID2 - w3.shape[0])))     # (8, 384)
    b3s = b3.reshape(1, 1).astype(jnp.float32)                           # (1, 1)
    return (w1p.astype(jnp.bfloat16), b1p,
            w2p.astype(jnp.bfloat16), b2p,
            w3r.astype(jnp.bfloat16), b3s)


def critic_forward(s, a, prepared, *, batch_tile=1024, gridless_max_batch=1024):
    """s: (B, obs), a: (B, act) -> q: (B, 1) float32."""
    w1, b1, w2, b2, w3, b3 = prepared
    B = s.shape[0]
    # Fused layer-1 input: tiny (B, obs+act) concat in the wrapper.
    x = jnp.concatenate([s, a], axis=1).astype(jnp.bfloat16)
    in_dim = x.shape[1]

    smem = pl.BlockSpec(memory_space=pltpu.MemorySpace.SMEM)

    if B <= gridless_max_batch:
        # Gridless: single invocation, everything VMEM-resident.  Best on
        # single-TC v5e/v6e for small/medium B (no serial grid-step overhead).
        vmem = pl.BlockSpec(memory_space=pltpu.MemorySpace.VMEM)
        q = pl.pallas_call(
            critic_kernel,
            out_shape=jax.ShapeDtypeStruct((1, B), jnp.float32),
            in_specs=[vmem, vmem, vmem, vmem, vmem, vmem, smem],
            out_specs=vmem,
        )(x, w1, b1, w2, b2, w3, b3)
        return q.reshape(B, 1)

    # Large batch: 1-D parallel grid over batch rows (megacore sharding on
    # v7x, bounded VMEM).  Weights use constant index_maps so they stay
    # VMEM-resident instead of being re-DMA'd per tile.  Output is a
    # (n_tiles, batch_tile) slab so the per-tile store is lane-dense.
    n_tiles = pl.cdiv(B, batch_tile)
    Bp = n_tiles * batch_tile
    if Bp != B:
        x = jnp.pad(x, ((0, Bp - B), (0, 0)))
    const = lambda i: (0, 0)
    q = pl.pallas_call(
        critic_kernel,
        out_shape=jax.ShapeDtypeStruct((n_tiles, batch_tile), jnp.float32),
        grid_spec=pltpu.PrefetchScalarGridSpec(
            num_scalar_prefetch=0,
            grid=(n_tiles,),
            in_specs=[
                pl.BlockSpec((batch_tile, in_dim), lambda i: (i, 0)),
                pl.BlockSpec((in_dim, HID1), const),
                pl.BlockSpec((1, HID1), const),
                pl.BlockSpec((HID1, HID2), const),
                pl.BlockSpec((1, HID2), const),
                pl.BlockSpec((W3_ROWS, HID2), const),
                smem,
            ],
            out_specs=pl.BlockSpec((1, batch_tile), lambda i: (i, 0)),
        ),
        compiler_params=pltpu.CompilerParams(
            dimension_semantics=("parallel",)),
    )(x, w1, b1, w2, b2, w3, b3)
    return q.reshape(Bp, 1)[:B]


def init_linear(key, fan_in, fan_out):
    """PyTorch nn.Linear default init: U(-1/sqrt(fan_in), 1/sqrt(fan_in)).
    Returns W in math layout (fan_in, fan_out) and b as (1, fan_out), f32."""
    kw, kb = jax.random.split(key)
    bound = 1.0 / jnp.sqrt(jnp.float32(fan_in))
    w = jax.random.uniform(kw, (fan_in, fan_out), jnp.float32, -bound, bound)
    b = jax.random.uniform(kb, (1, fan_out), jnp.float32, -bound, bound)
    return w, b


def _reference_q(s, a, params):
    w1, b1, w2, b2, w3, b3 = params
    x = jnp.concatenate([s, a], axis=1)
    h1 = jnp.maximum(x @ w1 + b1, 0.0)
    h2 = jnp.maximum(h1 @ w2 + b2, 0.0)
    return h2 @ w3 + b3


if __name__ == "__main__":
    # Pendulum-v0: obs_shape=3, action_shape=1.
    obs_shape, action_shape = 3, 1

    key = jax.random.PRNGKey(0)
    k1, k2, k3, ks, ka, ks2, ka2 = jax.random.split(key, 7)

    w1, b1 = init_linear(k1, obs_shape + action_shape, 400)
    w2, b2 = init_linear(k2, 400, 300)
    w3, b3 = init_linear(k3, 300, 1)
    raw_params = (w1, b1, w2, b2, w3, b3)
    prepared = prepare_params(raw_params)

    # --- small batch (gridless path) ---
    batch = 2
    s = jax.random.normal(ks, (batch, obs_shape), jnp.float32)
    a = jax.random.normal(ka, (batch, action_shape), jnp.float32)
    q = critic_forward(s, a, prepared)
    jax.block_until_ready(q)
    q_ref = _reference_q(s, a, raw_params)
    assert q.shape == (batch, 1)
    assert jnp.allclose(q, q_ref, atol=2e-2, rtol=2e-2), \
        f"small-batch mismatch: max err {jnp.max(jnp.abs(q - q_ref))}"

    # --- larger batch (1-D parallel grid over batch, with batch padding) ---
    big = 600
    s_big = jax.random.normal(ks2, (big, obs_shape), jnp.float32)
    a_big = jax.random.normal(ka2, (big, action_shape), jnp.float32)
    q_big = critic_forward(s_big, a_big, prepared,
                           batch_tile=256, gridless_max_batch=256)
    jax.block_until_ready(q_big)
    q_big_ref = _reference_q(s_big, a_big, raw_params)
    assert q_big.shape == (big, 1)
    assert jnp.allclose(q_big, q_big_ref, atol=2e-2, rtol=2e-2), \
        f"large-batch mismatch: max err {jnp.max(jnp.abs(q_big - q_big_ref))}"

    print("KERNEL_OK")
</pallas_src>

<mosaic_0001>
module attributes {stable_mosaic.version = 11 : i64} {
  func.func @critic_kernel(%arg0: memref<2x4xbf16, #tpu.memory_space<vmem>>, %arg1: memref<4x512xbf16, #tpu.memory_space<vmem>>, %arg2: memref<1x512xf32, #tpu.memory_space<vmem>>, %arg3: memref<512x384xbf16, #tpu.memory_space<vmem>>, %arg4: memref<1x384xf32, #tpu.memory_space<vmem>>, %arg5: memref<8x384xbf16, #tpu.memory_space<vmem>>, %arg6: memref<1x1xf32, #tpu.memory_space<smem>>, %arg7: memref<1x2xf32, #tpu.memory_space<vmem>>) attributes {dimension_semantics = [], scalar_prefetch = 0 : i64, scratch_operands = 0 : i64, tpu.core_type = #tpu.core_type<tc>} {
    %c0 = arith.constant 0 : index
    %c0_0 = arith.constant 0 : index
    %0 = vector.load %arg0[%c0, %c0_0] : memref<2x4xbf16, #tpu.memory_space<vmem>>, vector<2x4xbf16>
    %c0_1 = arith.constant 0 : index
    %c0_2 = arith.constant 0 : index
    %1 = vector.load %arg1[%c0_1, %c0_2] : memref<4x512xbf16, #tpu.memory_space<vmem>>, vector<4x512xbf16>
    %cst = arith.constant dense<0.000000e+00> : vector<2x512xf32>
    %2 = tpu.matmul %0, %1, %cst {dimension_numbers = #tpu.dot_dimension_numbers<[1], [0], [0], [1], [0, 0, 1, 1], [], []>} : vector<2x4xbf16>, vector<4x512xbf16>, vector<2x512xf32> -> vector<2x512xf32>
    %c0_3 = arith.constant 0 : index
    %c0_4 = arith.constant 0 : index
    %3 = vector.load %arg2[%c0_3, %c0_4] : memref<1x512xf32, #tpu.memory_space<vmem>>, vector<1x512xf32>
    %4 = vector.broadcast %3 : vector<1x512xf32> to vector<2x512xf32>
    %5 = arith.addf %2, %4 : vector<2x512xf32>
    %cst_5 = arith.constant 0.000000e+00 : f32
    %6 = vector.broadcast %cst_5 : f32 to vector<2x512xf32>
    %7 = arith.maximumf %5, %6 : vector<2x512xf32>
    %8 = arith.truncf %7 : vector<2x512xf32> to vector<2x512xbf16>
    %c0_6 = arith.constant 0 : index
    %c0_7 = arith.constant 0 : index
    %9 = vector.load %arg3[%c0_6, %c0_7] : memref<512x384xbf16, #tpu.memory_space<vmem>>, vector<512x384xbf16>
    %cst_8 = arith.constant dense<0.000000e+00> : vector<2x384xf32>
    %10 = tpu.matmul %8, %9, %cst_8 {dimension_numbers = #tpu.dot_dimension_numbers<[1], [0], [0], [1], [0, 0, 1, 1], [], []>} : vector<2x512xbf16>, vector<512x384xbf16>, vector<2x384xf32> -> vector<2x384xf32>
    %c0_9 = arith.constant 0 : index
    %c0_10 = arith.constant 0 : index
    %11 = vector.load %arg4[%c0_9, %c0_10] : memref<1x384xf32, #tpu.memory_space<vmem>>, vector<1x384xf32>
    %12 = vector.broadcast %11 : vector<1x384xf32> to vector<2x384xf32>
    %13 = arith.addf %10, %12 : vector<2x384xf32>
    %cst_11 = arith.constant 0.000000e+00 : f32
    %14 = vector.broadcast %cst_11 : f32 to vector<2x384xf32>
    %15 = arith.maximumf %13, %14 : vector<2x384xf32>
    %16 = arith.truncf %15 : vector<2x384xf32> to vector<2x384xbf16>
    %c0_12 = arith.constant 0 : index
    %c0_13 = arith.constant 0 : index
    %17 = vector.load %arg5[%c0_12, %c0_13] : memref<8x384xbf16, #tpu.memory_space<vmem>>, vector<8x384xbf16>
    %cst_14 = arith.constant dense<0.000000e+00> : vector<8x2xf32>
    %18 = tpu.matmul %17, %16, %cst_14 {dimension_numbers = #tpu.dot_dimension_numbers<[1], [1], [0], [0], [0, 0, 1, 0], [], []>} : vector<8x384xbf16>, vector<2x384xbf16>, vector<8x2xf32> -> vector<8x2xf32>
    %19 = vector.extract_strided_slice %18 {offsets = [0, 0], sizes = [1, 2], strides = [1, 1]} : vector<8x2xf32> to vector<1x2xf32>
    %c0_15 = arith.constant 0 : index
    %c0_16 = arith.constant 0 : index
    %20 = memref.load %arg6[%c0_15, %c0_16] : memref<1x1xf32, #tpu.memory_space<smem>>
    %21 = vector.broadcast %20 : f32 to vector<1x2xf32>
    %22 = arith.addf %19, %21 : vector<1x2xf32>
    %c0_17 = arith.constant 0 : index
    %c0_18 = arith.constant 0 : index
    %23 = vector.load %arg7[%c0_17, %c0_18] : memref<1x2xf32, #tpu.memory_space<vmem>>, vector<1x2xf32>
    tpu.vector_store %arg7[%c0_17, %c0_18], %22 {strides = array<i32>} : memref<1x2xf32, #tpu.memory_space<vmem>>, vector<1x2xf32>,
    return
  }
}

</mosaic_0001>

<llo_original>
// kernel: tpu_custom_call.1
$region0: #{tpu_custom_call.1}
  #allocation0 [shape = 'u32[]', space=smem, size = 0x4, offset = 0x4, fixed_abs, tag = 'smem constant byte address 0x4 - core index']
  #allocation1 [shape = 'u32[144,128]{1,0:T(1,128)}', space=vmem, size = 0x12000, scoped, tag = 'internal scratch']
  #allocation2 [shape = 'f32[1,1]{1,0:T(1,128)S(6)}', space=smem, size = 0x200, scoped, tag = 'scoped memory for tpu_custom_call.1']
  %s0 = inlined_call_operand.hbm [shape: bf16[2,4], index: 0, kind: input, shape index: {}]
  %s1 = inlined_call_operand.hbm [shape: bf16[4,512], index: 1, kind: input, shape index: {}]
  %s2 = inlined_call_operand.vmem [shape: f32[1,512], index: 2, kind: input, shape index: {}]
  %s3 = inlined_call_operand.hbm [shape: bf16[512,384], index: 3, kind: input, shape index: {}]
  %s4 = inlined_call_operand.vmem [shape: f32[1,384], index: 4, kind: input, shape index: {}]
  %s5 = inlined_call_operand.vmem [shape: bf16[8,384], index: 5, kind: input, shape index: {}]
  %s6 = inlined_call_operand.<no memory space> [shape: f32[1,1], index: 6, kind: input, shape index: {}]
  %s7 = inlined_call_operand.hbm [shape: f32[1,2], index: 7, kind: output, shape index: {}]
  %s8 = sld [smem:[#allocation0]]
  $region50: #{tpu_custom_call.1} parent=0
    _
  %s10 = ssub.s32 1, %s8
  %s11 = scalar_select 0, %s10, %s8
  %12 = sst [smem:[#allocation2]] %s6
  $region1: #{tpu_custom_call.1} parent=0
    #allocation3 [shape = 'u8[512]{0}', space=vmem, size = 0x400, scoped, tag = 'input window, operand 0, single buffered']
    #allocation4 [shape = 's32[1]{0}', space=sflag, size = 0x4, scoped, tag = 'scoped memory for tpu_custom_call.1']
    #allocation5 [shape = 's32[1]{0}', space=sflag, size = 0x4, scoped, tag = 'scoped memory for tpu_custom_call.1']
    #allocation6 [shape = 'u8[4096]{0}', space=vmem, size = 0x1000, scoped, tag = 'input window, operand 1, single buffered']
    #allocation7 [shape = 's32[1]{0}', space=sflag, size = 0x4, scoped, tag = 'scoped memory for tpu_custom_call.1']
    #allocation8 [shape = 'u8[393216]{0}', space=vmem, size = 0x60000, scoped, tag = 'input window, operand 3, single buffered']
    #allocation9 [shape = 'u8[512]{0}', space=vmem, size = 0x400, scoped, tag = 'output window, operand 0, single buffered']
    %13 = vsyncpa [#allocation4], 0
    %14 = vsyncpa [#allocation7], 0
    %15 = vsyncpa [#allocation5], 0
    // Predicated region
    $region2: #{tpu_custom_call.1} parent=1 // pred_check
      _
    $region3: #{tpu_custom_call.1} parent=1 // pred_check_branch
      %17 = sbr.rel (0) target = $region5
    $region4: #{tpu_custom_call.1} parent=1 // pred_region
      %s19 = ssub.s32 16, 16
      %20 = vsyncadd [#allocation4], %s19
      %s22 = sshll.u32 [#allocation3], 4
      %s23 = int_to_ptr.vmem [resolvable:$true] %s22
      %25 = dma.hbm_to_vmem [thread:$0]  %s0, 16, %s23, [#allocation4]
    $region5: #{tpu_custom_call.1} parent=1 // pred_fallthru
      _
    // Predicated region
    $region6: #{tpu_custom_call.1} parent=1 // pred_check
      _
    $region7: #{tpu_custom_call.1} parent=1 // pred_check_branch
      %27 = sbr.rel (0) target = $region9
    $region8: #{tpu_custom_call.1} parent=1 // pred_region
      %s29 = ssub.s32 128, 128
      %30 = vsyncadd [#allocation7], %s29
      %s32 = sshll.u32 [#allocation6], 4
      %s33 = int_to_ptr.vmem [resolvable:$true] %s32
      %35 = dma.hbm_to_vmem [thread:$0]  %s1, 128, %s33, [#allocation7]
    $region9: #{tpu_custom_call.1} parent=1 // pred_fallthru
      _
    // Predicated region
    $region10: #{tpu_custom_call.1} parent=1 // pred_check
      _
    $region11: #{tpu_custom_call.1} parent=1 // pred_check_branch
      %37 = sbr.rel (0) target = $region13
    $region12: #{tpu_custom_call.1} parent=1 // pred_region
      _
    $region13: #{tpu_custom_call.1} parent=1 // pred_fallthru
      _
    // Predicated region
    $region14: #{tpu_custom_call.1} parent=1 // pred_check
      _
    $region15: #{tpu_custom_call.1} parent=1 // pred_check_branch
      %39 = sbr.rel (0) target = $region17
    $region16: #{tpu_custom_call.1} parent=1 // pred_region
      %s41 = ssub.s32 12288, 12288
      %42 = vsyncadd [#allocation7], %s41
      %s43 = sshll.u32 [#allocation8], 4
      %s44 = int_to_ptr.vmem [resolvable:$true] %s43
      %49 = dma.hbm_to_vmem [thread:$0]  %s3, 12288, %s44, [#allocation7], 192, 192, 12
    $region17: #{tpu_custom_call.1} parent=1 // pred_fallthru
      _
    // Predicated region
    $region18: #{tpu_custom_call.1} parent=1 // pred_check
      _
    $region19: #{tpu_custom_call.1} parent=1 // pred_check_branch
      %51 = sbr.rel (0) target = $region21
    $region20: #{tpu_custom_call.1} parent=1 // pred_region
      _
    $region21: #{tpu_custom_call.1} parent=1 // pred_fallthru
      _
    // Predicated region
    $region22: #{tpu_custom_call.1} parent=1 // pred_check
      _
    $region23: #{tpu_custom_call.1} parent=1 // pred_check_branch
      %53 = sbr.rel (0) target = $region25
    $region24: #{tpu_custom_call.1} parent=1 // pred_region
      _
    $region25: #{tpu_custom_call.1} parent=1 // pred_fallthru
      _
    // Predicated region
    $region26: #{tpu_custom_call.1} parent=1 // pred_check
      _
    $region27: #{tpu_custom_call.1} parent=1 // pred_check_branch
      %55 = sbr.rel (0) target = $region29
    $region28: #{tpu_custom_call.1} parent=1 // pred_region
      _
    $region29: #{tpu_custom_call.1} parent=1 // pred_fallthru
      _
    // Predicated region
    $region30: #{tpu_custom_call.1} parent=1 // pred_check
      _
    $region31: #{tpu_custom_call.1} parent=1 // pred_check_branch
      %57 = sbr.rel (0) target = $region33
    $region32: #{tpu_custom_call.1} parent=1 // pred_region
      %58 = dma.done [#allocation4], 16
    $region33: #{tpu_custom_call.1} parent=1 // pred_fallthru
      _
    // Predicated region
    $region34: #{tpu_custom_call.1} parent=1 // pred_check
      _
    $region35: #{tpu_custom_call.1} parent=1 // pred_check_branch
      %60 = sbr.rel (0) target = $region37
    $region36: #{tpu_custom_call.1} parent=1 // pred_region
      %61 = dma.done [#allocation7], 128
    $region37: #{tpu_custom_call.1} parent=1 // pred_fallthru
      _
    // Predicated region
    $region38: #{tpu_custom_call.1} parent=1 // pred_check
      _
    $region39: #{tpu_custom_call.1} parent=1 // pred_check_branch
      %63 = sbr.rel (0) target = $region41
    $region40: #{tpu_custom_call.1} parent=1 // pred_region
      %64 = dma.done [#allocation7], 12288
    $region41: #{tpu_custom_call.1} parent=1 // pred_fallthru
      _
    %v66 = vld [vmem:[#allocation3] sm:$0x1]
    %v67 = vld [vmem:[#allocation6] sm:$0xff]
    %v68 = vld [vmem:[%s2] sm:$0xf]
    %v70 = vlaneseq
    %v71 = vshrl.u32 %v70, 7
    %v72 = vsub.s32 0, %v71
    %v73 = vrot.slane %v68, %v72
    %v74 = vlaneseq
    %v75 = vshrl.u32 %v74, 7
    %v76 = vsub.s32 1, %v75
    %v77 = vrot.slane %v68, %v76
    %v78 = vlaneseq
    %v79 = vshrl.u32 %v78, 7
    %v80 = vsub.s32 2, %v79
    %v81 = vrot.slane %v68, %v80
    %v82 = vlaneseq
    %v83 = vshrl.u32 %v82, 7
    %v84 = vsub.s32 3, %v83
    %v85 = vrot.slane %v68, %v84
    %v91 = vcombine.high %v67, %v67
    %v93 = vunpack.c.l.s4 1983009808
    %v94 = vunpack.c.0.s8 %v93
    %v95 = vlaneseq
    %v96 = vshrl.u32 %v95, 7
    %v97 = vsub.s32 %v94, %v96
    %v98 = vrot.slane %v67, %v97
    %v100 = vunpack.c.l.s4 1983009808
    %v101 = vunpack.c.0.s8 %v100
    %v102 = vlaneseq
    %v103 = vshrl.u32 %v102, 7
    %v104 = vsub.s32 %v101, %v103
    %v105 = vrot.slane %v91, %v104
    %v106 = vcombine.high %v98, %v98
    %v107 = vcombine.high %v105, %v105
    %vm108 = vcmask 31744
    %v110 = vsel %vm108, %v66, 0
    %vm112 = vcmask 1041408
    %v114 = vsel %vm112, %v98, 0
    %v117 = vsel %vm112, %v106, 0
    %v120 = vsel %vm112, %v105, 0
    %v123 = vsel %vm112, %v107, 0
    %125 = vmatprep.subr.bf16.mxu0 %v117
    %126 = vmatpush1.bf16.msra.mxu0 %v114
    %127 = vmatprep.subr.bf16.mxu0 0
    %128 = vmatpush1.bf16.msra.mxu0 0
    %129 = vmatprep.subr.bf16.mxu0 0
    %130 = vmatpush1.bf16.msra.mxu0 0
    %131 = vmatprep.subr.bf16.mxu0 0
    %132 = vmatpush1.bf16.msra.mxu0 0
    %133 = vmatprep.subr.bf16.mxu0 0
    %134 = vmatpush1.bf16.msra.mxu0 0
    %135 = vmatprep.subr.bf16.mxu0 0
    %136 = vmatpush1.bf16.msra.mxu0 0
    %137 = vmatprep.subr.bf16.mxu0 0
    %138 = vmatpush1.bf16.msra.mxu0 0
    %139 = vmatprep.subr.bf16.mxu0 0
    %140 = vmatpush1.bf16.msra.mxu0 0
    %141 = vmatprep.subr.bf16.mxu0 0
    %142 = vmatpush1.bf16.msra.mxu0 0
    %143 = vmatprep.subr.bf16.mxu0 0
    %144 = vmatpush1.bf16.msra.mxu0 0
    %145 = vmatprep.subr.bf16.mxu0 0
    %146 = vmatpush1.bf16.msra.mxu0 0
    %147 = vmatprep.subr.bf16.mxu0 0
    %148 = vmatpush1.bf16.msra.mxu0 0
    %149 = vmatprep.subr.bf16.mxu0 0
    %150 = vmatpush1.bf16.msra.mxu0 0
    %151 = vmatprep.subr.bf16.mxu0 0
    %152 = vmatpush1.bf16.msra.mxu0 0
    %153 = vmatprep.subr.bf16.mxu0 0
    %154 = vmatpush1.bf16.msra.mxu0 0
    %155 = vmatprep.subr.bf16.mxu0 0
    %156 = vmatpush1.bf16.msra.mxu0 0
    %157 = vmatprep.mubr.bf16.mxu0 0
    %158 = vmatmul.mubr.bf16.gmra.mrb[0].mxu0 %v110
    %v159 = vpop.f32.mrb[0].mxu0
    %v160 = vadd.f32 %v73, %v159
    %v161 = vpop.f32.mrb[0].mxu0
    %v162 = vadd.f32 %v77, %v161
    %v163 = vpop.f32.mrb[0].mxu0
    %v164 = vpop.f32.mrb[0].mxu0
    %165 = vdwg.mxu0
    %166 = vmatprep.subr.bf16.mxu0 %v123
    %167 = vmatpush1.bf16.msra.mxu0 %v120
    %168 = vmatprep.subr.bf16.mxu0 0
    %169 = vmatpush1.bf16.msra.mxu0 0
    %170 = vmatprep.subr.bf16.mxu0 0
    %171 = vmatpush1.bf16.msra.mxu0 0
    %172 = vmatprep.subr.bf16.mxu0 0
    %173 = vmatpush1.bf16.msra.mxu0 0
    %174 = vmatprep.subr.bf16.mxu0 0
    %175 = vmatpush1.bf16.msra.mxu0 0
    %176 = vmatprep.subr.bf16.mxu0 0
    %177 = vmatpush1.bf16.msra.mxu0 0
    %178 = vmatprep.subr.bf16.mxu0 0
    %179 = vmatpush1.bf16.msra.mxu0 0
    %180 = vmatprep.subr.bf16.mxu0 0
    %181 = vmatpush1.bf16.msra.mxu0 0
    %182 = vmatprep.subr.bf16.mxu0 0
    %183 = vmatpush1.bf16.msra.mxu0 0
    %184 = vmatprep.subr.bf16.mxu0 0
    %185 = vmatpush1.bf16.msra.mxu0 0
    %186 = vmatprep.subr.bf16.mxu0 0
    %187 = vmatpush1.bf16.msra.mxu0 0
    %188 = vmatprep.subr.bf16.mxu0 0
    %189 = vmatpush1.bf16.msra.mxu0 0
    %190 = vmatprep.subr.bf16.mxu0 0
    %191 = vmatpush1.bf16.msra.mxu0 0
    %192 = vmatprep.subr.bf16.mxu0 0
    %193 = vmatpush1.bf16.msra.mxu0 0
    %194 = vmatprep.subr.bf16.mxu0 0
    %195 = vmatpush1.bf16.msra.mxu0 0
    %196 = vmatprep.subr.bf16.mxu0 0
    %197 = vmatpush1.bf16.msra.mxu0 0
    %198 = vmatprep.mubr.bf16.mxu0 0
    %199 = vmatmul.mubr.bf16.gmra.mrb[0].mxu0 %v110
    %v200 = vpop.f32.mrb[0].mxu0
    %v201 = vadd.f32 %v81, %v200
    %v202 = vpop.f32.mrb[0].mxu0
    %v203 = vadd.f32 %v85, %v202
    %v204 = vpop.f32.mrb[0].mxu0
    %v205 = vpop.f32.mrb[0].mxu0
    %206 = vdwg.mxu0
    %v207 = vmax.f32 %v160, 0.0
    %v208 = vmax.f32 %v162, 0.0
    %v209 = vmax.f32 %v201, 0.0
    %v210 = vmax.f32 %v203, 0.0
    %v211 = vpack.c.bf16 %v207, %v207
    %v212 = vpack.c.bf16 %v208, %v208
    %v213 = vpack.c.bf16 %v209, %v209
    %v214 = vpack.c.bf16 %v210, %v210
    %v215 = vld [vmem:[#allocation8] sm:$0xff]
    %v216 = vld [vmem:[#allocation8 + $0x8] sm:$0xf]
    %v217 = vld [vmem:[#allocation8 + $0xc] sm:$0xff]
    %v218 = vld [vmem:[#allocation8 + $0x14] sm:$0xf]
    %v219 = vld [vmem:[#allocation8 + $0x18] sm:$0xff]
    %v220 = vld [vmem:[#allocation8 + $0x20] sm:$0xf]
    %v221 = vld [vmem:[#allocation8 + $0x24] sm:$0xff]
    %v222 = vld [vmem:[#allocation8 + $0x2c] sm:$0xf]
    %v223 = vld [vmem:[#allocation8 + $0x30] sm:$0xff]
    %v224 = vld [vmem:[#allocation8 + $0x38] sm:$0xf]
    %v225 = vld [vmem:[#allocation8 + $0x3c] sm:$0xff]
    %v226 = vld [vmem:[#allocation8 + $0x44] sm:$0xf]
    %v227 = vld [vmem:[#allocation8 + $0x48] sm:$0xff]
    %v228 = vld [vmem:[#allocation8 + $0x50] sm:$0xf]
    %v229 = vld [vmem:[#allocation8 + $0x54] sm:$0xff]
    %v230 = vld [vmem:[#allocation8 + $0x5c] sm:$0xf]
    %v231 = vld [vmem:[#allocation8 + $0x60] sm:$0xff]
    %v232 = vld [vmem:[#allocation8 + $0x68] sm:$0xf]
    %v233 = vld [vmem:[#allocation8 + $0x6c] sm:$0xff]
    %v234 = vld [vmem:[#allocation8 + $0x74] sm:$0xf]
    %v235 = vld [vmem:[#allocation8 + $0x78] sm:$0xff]
    %v236 = vld [vmem:[#allocation8 + $0x80] sm:$0xf]
    %v237 = vld [vmem:[#allocation8 + $0x84] sm:$0xff]
    %v238 = vld [vmem:[#allocation8 + $0x8c] sm:$0xf]
    %v239 = vld [vmem:[#allocation8 + $0x90] sm:$0xff]
    %v240 = vld [vmem:[#allocation8 + $0x98] sm:$0xf]
    %v241 = vld [vmem:[#allocation8 + $0x9c] sm:$0xff]
    %v242 = vld [vmem:[#allocation8 + $0xa4] sm:$0xf]
    %v243 = vld [vmem:[#allocation8 + $0xa8] sm:$0xff]
    %v244 = vld [vmem:[#allocation8 + $0xb0] sm:$0xf]
    %v245 = vld [vmem:[#allocation8 + $0xb4] sm:$0xff]
    %v246 = vld [vmem:[#allocation8 + $0xbc] sm:$0xf]
    %v247 = vld [vmem:[#allocation8 + $0xc0] sm:$0xff]
    %v248 = vld [vmem:[#allocation8 + $0xc8] sm:$0xf]
    %v249 = vld [vmem:[#allocation8 + $0xcc] sm:$0xff]
    %v250 = vld [vmem:[#allocation8 + $0xd4] sm:$0xf]
    %v251 = vld [vmem:[#allocation8 + $0xd8] sm:$0xff]
    %v252 = vld [vmem:[#allocation8 + $0xe0] sm:$0xf]
    %v253 = vld [vmem:[#allocation8 + $0xe4] sm:$0xff]
    %v254 = vld [vmem:[#allocation8 + $0xec] sm:$0xf]
    %v255 = vld [vmem:[#allocation8 + $0xf0] sm:$0xff]
    %v256 = vld [vmem:[#allocation8 + $0xf8] sm:$0xf]
    %v257 = vld [vmem:[#allocation8 + $0xfc] sm:$0xff]
    %v258 = vld [vmem:[#allocation8 + $0x104] sm:$0xf]
    %v259 = vld [vmem:[#allocation8 + $0x108] sm:$0xff]
    %v260 = vld [vmem:[#allocation8 + $0x110] sm:$0xf]
    %v261 = vld [vmem:[#allocation8 + $0x114] sm:$0xff]
    %v262 = vld [vmem:[#allocation8 + $0x11c] sm:$0xf]
    %v263 = vld [vmem:[#allocation8 + $0x120] sm:$0xff]
    %v264 = vld [vmem:[#allocation8 + $0x128] sm:$0xf]
    %v265 = vld [vmem:[#allocation8 + $0x12c] sm:$0xff]
    %v266 = vld [vmem:[#allocation8 + $0x134] sm:$0xf]
    %v267 = vld [vmem:[#allocation8 + $0x138] sm:$0xff]
    %v268 = vld [vmem:[#allocation8 + $0x140] sm:$0xf]
    %v269 = vld [vmem:[#allocation8 + $0x144] sm:$0xff]
    %v270 = vld [vmem:[#allocation8 + $0x14c] sm:$0xf]
    %v271 = vld [vmem:[#allocation8 + $0x150] sm:$0xff]
    %v272 = vld [vmem:[#allocation8 + $0x158] sm:$0xf]
    %v273 = vld [vmem:[#allocation8 + $0x15c] sm:$0xff]
    %v274 = vld [vmem:[#allocation8 + $0x164] sm:$0xf]
    %v275 = vld [vmem:[#allocation8 + $0x168] sm:$0xff]
    %v276 = vld [vmem:[#allocation8 + $0x170] sm:$0xf]
    %v277 = vld [vmem:[#allocation8 + $0x174] sm:$0xff]
    %v278 = vld [vmem:[#allocation8 + $0x17c] sm:$0xf]
    %v279 = vld [vmem:[#allocation8 + $0x180] sm:$0xff]
    %v280 = vld [vmem:[#allocation8 + $0x188] sm:$0xf]
    %v281 = vld [vmem:[#allocation8 + $0x18c] sm:$0xff]
    %v282 = vld [vmem:[#allocation8 + $0x194] sm:$0xf]
    %v283 = vld [vmem:[#allocation8 + $0x198] sm:$0xff]
    %v284 = vld [vmem:[#allocation8 + $0x1a0] sm:$0xf]
    %v285 = vld [vmem:[#allocation8 + $0x1a4] sm:$0xff]
    %v286 = vld [vmem:[#allocation8 + $0x1ac] sm:$0xf]
    %v287 = vld [vmem:[#allocation8 + $0x1b0] sm:$0xff]
    %v288 = vld [vmem:[#allocation8 + $0x1b8] sm:$0xf]
    %v289 = vld [vmem:[#allocation8 + $0x1bc] sm:$0xff]
    %v290 = vld [vmem:[#allocation8 + $0x1c4] sm:$0xf]
    %v291 = vld [vmem:[#allocation8 + $0x1c8] sm:$0xff]
    %v292 = vld [vmem:[#allocation8 + $0x1d0] sm:$0xf]
    %v293 = vld [vmem:[#allocation8 + $0x1d4] sm:$0xff]
    %v294 = vld [vmem:[#allocation8 + $0x1dc] sm:$0xf]
    %v295 = vld [vmem:[#allocation8 + $0x1e0] sm:$0xff]
    %v296 = vld [vmem:[#allocation8 + $0x1e8] sm:$0xf]
    %v297 = vld [vmem:[#allocation8 + $0x1ec] sm:$0xff]
    %v298 = vld [vmem:[#allocation8 + $0x1f4] sm:$0xf]
    %v299 = vld [vmem:[#allocation8 + $0x1f8] sm:$0xff]
    %v300 = vld [vmem:[#allocation8 + $0x200] sm:$0xf]
    %v301 = vld [vmem:[#allocation8 + $0x204] sm:$0xff]
    %v302 = vld [vmem:[#allocation8 + $0x20c] sm:$0xf]
    %v303 = vld [vmem:[#allocation8 + $0x210] sm:$0xff]
    %v304 = vld [vmem:[#allocation8 + $0x218] sm:$0xf]
    %v305 = vld [vmem:[#allocation8 + $0x21c] sm:$0xff]
    %v306 = vld [vmem:[#allocation8 + $0x224] sm:$0xf]
    %v307 = vld [vmem:[#allocation8 + $0x228] sm:$0xff]
    %v308 = vld [vmem:[#allocation8 + $0x230] sm:$0xf]
    %v309 = vld [vmem:[#allocation8 + $0x234] sm:$0xff]
    %v310 = vld [vmem:[#allocation8 + $0x23c] sm:$0xf]
    %v311 = vld [vmem:[#allocation8 + $0x240] sm:$0xff]
    %v312 = vld [vmem:[#allocation8 + $0x248] sm:$0xf]
    %v313 = vld [vmem:[#allocation8 + $0x24c] sm:$0xff]
    %v314 = vld [vmem:[#allocation8 + $0x254] sm:$0xf]
    %v315 = vld [vmem:[#allocation8 + $0x258] sm:$0xff]
    %v316 = vld [vmem:[#allocation8 + $0x260] sm:$0xf]
    %v317 = vld [vmem:[#allocation8 + $0x264] sm:$0xff]
    %v318 = vld [vmem:[#allocation8 + $0x26c] sm:$0xf]
    %v319 = vld [vmem:[#allocation8 + $0x270] sm:$0xff]
    %v320 = vld [vmem:[#allocation8 + $0x278] sm:$0xf]
    %v321 = vld [vmem:[#allocation8 + $0x27c] sm:$0xff]
    %v322 = vld [vmem:[#allocation8 + $0x284] sm:$0xf]
    %v323 = vld [vmem:[#allocation8 + $0x288] sm:$0xff]
    %v324 = vld [vmem:[#allocation8 + $0x290] sm:$0xf]
    %v325 = vld [vmem:[#allocation8 + $0x294] sm:$0xff]
    %v326 = vld [vmem:[#allocation8 + $0x29c] sm:$0xf]
    %v327 = vld [vmem:[#allocation8 + $0x2a0] sm:$0xff]
    %v328 = vld [vmem:[#allocation8 + $0x2a8] sm:$0xf]
    %v329 = vld [vmem:[#allocation8 + $0x2ac] sm:$0xff]
    %v330 = vld [vmem:[#allocation8 + $0x2b4] sm:$0xf]
    %v331 = vld [vmem:[#allocation8 + $0x2b8] sm:$0xff]
    %v332 = vld [vmem:[#allocation8 + $0x2c0] sm:$0xf]
    %v333 = vld [vmem:[#allocation8 + $0x2c4] sm:$0xff]
    %v334 = vld [vmem:[#allocation8 + $0x2cc] sm:$0xf]
    %v335 = vld [vmem:[#allocation8 + $0x2d0] sm:$0xff]
    %v336 = vld [vmem:[#allocation8 + $0x2d8] sm:$0xf]
    %v337 = vld [vmem:[#allocation8 + $0x2dc] sm:$0xff]
    %v338 = vld [vmem:[#allocation8 + $0x2e4] sm:$0xf]
    %v339 = vld [vmem:[#allocation8 + $0x2e8] sm:$0xff]
    %v340 = vld [vmem:[#allocation8 + $0x2f0] sm:$0xf]
    %v341 = vld [vmem:[#allocation8 + $0x2f4] sm:$0xff]
    %v342 = vld [vmem:[#allocation8 + $0x2fc] sm:$0xf]
    %v343 = vld [vmem:[%s4] sm:$0x7]
    %v345 = vlaneseq
    %v346 = vshrl.u32 %v345, 7
    %v347 = vsub.s32 0, %v346
    %v348 = vrot.slane %v343, %v347
    %v349 = vlaneseq
    %v350 = vshrl.u32 %v349, 7
    %v351 = vsub.s32 1, %v350
    %v352 = vrot.slane %v343, %v351
    %v353 = vlaneseq
    %v354 = vshrl.u32 %v353, 7
    %v355 = vsub.s32 2, %v354
    %v356 = vrot.slane %v343, %v355
    %v488 = vunpack.c.l.b16 %v215
    %v489 = vunpack.c.h.b16 %v215
    %v490 = vunpack.c.l.b16 %v216
    %v491 = vunpack.c.l.b16 %v217
    %v492 = vunpack.c.h.b16 %v217
    %v493 = vunpack.c.l.b16 %v218
    %v494 = vunpack.c.l.b16 %v219
    %v495 = vunpack.c.h.b16 %v219
    %v496 = vunpack.c.l.b16 %v220
    %v497 = vunpack.c.l.b16 %v221
    %v498 = vunpack.c.h.b16 %v221
    %v499 = vunpack.c.l.b16 %v222
    %v500 = vunpack.c.l.b16 %v223
    %v501 = vunpack.c.h.b16 %v223
    %v502 = vunpack.c.l.b16 %v224
    %v503 = vunpack.c.l.b16 %v225
    %v504 = vunpack.c.h.b16 %v225
    %v505 = vunpack.c.l.b16 %v226
    %v506 = vunpack.c.l.b16 %v227
    %v507 = vunpack.c.h.b16 %v227
    %v508 = vunpack.c.l.b16 %v228
    %v509 = vunpack.c.l.b16 %v229
    %v510 = vunpack.c.h.b16 %v229
    %v511 = vunpack.c.l.b16 %v230
    %v512 = vunpack.c.l.b16 %v231
    %v513 = vunpack.c.h.b16 %v231
    %v514 = vunpack.c.l.b16 %v232
    %v515 = vunpack.c.l.b16 %v233
    %v516 = vunpack.c.h.b16 %v233
    %v517 = vunpack.c.l.b16 %v234
    %v518 = vunpack.c.l.b16 %v235
    %v519 = vunpack.c.h.b16 %v235
    %v520 = vunpack.c.l.b16 %v236
    %v521 = vunpack.c.l.b16 %v237
    %v522 = vunpack.c.h.b16 %v237
    %v523 = vunpack.c.l.b16 %v238
    %v524 = vunpack.c.l.b16 %v239
    %v525 = vunpack.c.h.b16 %v239
    %v526 = vunpack.c.l.b16 %v240
    %v527 = vunpack.c.l.b16 %v241
    %v528 = vunpack.c.h.b16 %v241
    %v529 = vunpack.c.l.b16 %v242
    %v530 = vunpack.c.l.b16 %v243
    %v531 = vunpack.c.h.b16 %v243
    %v532 = vunpack.c.l.b16 %v244
    %v533 = vunpack.c.l.b16 %v245
    %v534 = vunpack.c.h.b16 %v245
    %v535 = vunpack.c.l.b16 %v246
    %v536 = vunpack.c.l.b16 %v247
    %v537 = vunpack.c.h.b16 %v247
    %v538 = vunpack.c.l.b16 %v248
    %v539 = vunpack.c.l.b16 %v249
    %v540 = vunpack.c.h.b16 %v249
    %v541 = vunpack.c.l.b16 %v250
    %v542 = vunpack.c.l.b16 %v251
    %v543 = vunpack.c.h.b16 %v251
    %v544 = vunpack.c.l.b16 %v252
    %v545 = vunpack.c.l.b16 %v253
    %v546 = vunpack.c.h.b16 %v253
    %v547 = vunpack.c.l.b16 %v254
    %v548 = vunpack.c.l.b16 %v255
    %v549 = vunpack.c.h.b16 %v255
    %v550 = vunpack.c.l.b16 %v256
    %v551 = vunpack.c.l.b16 %v257
    %v552 = vunpack.c.h.b16 %v257
    %v553 = vunpack.c.l.b16 %v258
    %v554 = vunpack.c.l.b16 %v259
    %v555 = vunpack.c.h.b16 %v259
    %v556 = vunpack.c.l.b16 %v260
    %v557 = vunpack.c.l.b16 %v261
    %v558 = vunpack.c.h.b16 %v261
    %v559 = vunpack.c.l.b16 %v262
    %v560 = vunpack.c.l.b16 %v263
    %v561 = vunpack.c.h.b16 %v263
    %v562 = vunpack.c.l.b16 %v264
    %v563 = vunpack.c.l.b16 %v265
    %v564 = vunpack.c.h.b16 %v265
    %v565 = vunpack.c.l.b16 %v266
    %v566 = vunpack.c.l.b16 %v267
    %v567 = vunpack.c.h.b16 %v267
    %v568 = vunpack.c.l.b16 %v268
    %v569 = vunpack.c.l.b16 %v269
    %v570 = vunpack.c.h.b16 %v269
    %v571 = vunpack.c.l.b16 %v270
    %v572 = vunpack.c.l.b16 %v271
    %v573 = vunpack.c.h.b16 %v271
    %v574 = vunpack.c.l.b16 %v272
    %v575 = vunpack.c.l.b16 %v273
    %v576 = vunpack.c.h.b16 %v273
    %v577 = vunpack.c.l.b16 %v274
    %v578 = vunpack.c.l.b16 %v275
    %v579 = vunpack.c.h.b16 %v275
    %v580 = vunpack.c.l.b16 %v276
    %v581 = vunpack.c.l.b16 %v277
    %v582 = vunpack.c.h.b16 %v277
    %v583 = vunpack.c.l.b16 %v278
    %v584 = vunpack.c.l.b16 %v279
    %v585 = vunpack.c.h.b16 %v279
    %v586 = vunpack.c.l.b16 %v280
    %v587 = vunpack.c.l.b16 %v281
    %v588 = vunpack.c.h.b16 %v281
    %v589 = vunpack.c.l.b16 %v282
    %v590 = vunpack.c.l.b16 %v283
    %v591 = vunpack.c.h.b16 %v283
    %v592 = vunpack.c.l.b16 %v284
    %v593 = vunpack.c.l.b16 %v285
    %v594 = vunpack.c.h.b16 %v285
    %v595 = vunpack.c.l.b16 %v286
    %v596 = vunpack.c.l.b16 %v287
    %v597 = vunpack.c.h.b16 %v287
    %v598 = vunpack.c.l.b16 %v288
    %v599 = vunpack.c.l.b16 %v289
    %v600 = vunpack.c.h.b16 %v289
    %v601 = vunpack.c.l.b16 %v290
    %v602 = vunpack.c.l.b16 %v291
    %v603 = vunpack.c.h.b16 %v291
    %v604 = vunpack.c.l.b16 %v292
    %v605 = vunpack.c.l.b16 %v293
    %v606 = vunpack.c.h.b16 %v293
    %v607 = vunpack.c.l.b16 %v294
    %v608 = vunpack.c.l.b16 %v295
    %v609 = vunpack.c.h.b16 %v295
    %v610 = vunpack.c.l.b16 %v296
    %v611 = vunpack.c.l.b16 %v297
    %v612 = vunpack.c.h.b16 %v297
    %v613 = vunpack.c.l.b16 %v298
    %v614 = vunpack.c.l.b16 %v299
    %v615 = vunpack.c.h.b16 %v299
    %v616 = vunpack.c.l.b16 %v300
    %v617 = vunpack.c.l.b16 %v301
    %v618 = vunpack.c.h.b16 %v301
    %v619 = vunpack.c.l.b16 %v302
    %v620 = vunpack.c.l.b16 %v303
    %v621 = vunpack.c.h.b16 %v303
    %v622 = vunpack.c.l.b16 %v304
    %v623 = vunpack.c.l.b16 %v305
    %v624 = vunpack.c.h.b16 %v305
    %v625 = vunpack.c.l.b16 %v306
    %v626 = vunpack.c.l.b16 %v307
    %v627 = vunpack.c.h.b16 %v307
    %v628 = vunpack.c.l.b16 %v308
    %v629 = vunpack.c.l.b16 %v309
    %v630 = vunpack.c.h.b16 %v309
    %v631 = vunpack.c.l.b16 %v310
    %v632 = vunpack.c.l.b16 %v311
    %v633 = vunpack.c.h.b16 %v311
    %v634 = vunpack.c.l.b16 %v312
    %v635 = vunpack.c.l.b16 %v313
    %v636 = vunpack.c.h.b16 %v313
    %v637 = vunpack.c.l.b16 %v314
    %v638 = vunpack.c.l.b16 %v315
    %v639 = vunpack.c.h.b16 %v315
    %v640 = vunpack.c.l.b16 %v316
    %v641 = vunpack.c.l.b16 %v317
    %v642 = vunpack.c.h.b16 %v317
    %v643 = vunpack.c.l.b16 %v318
    %v644 = vunpack.c.l.b16 %v319
    %v645 = vunpack.c.h.b16 %v319
    %v646 = vunpack.c.l.b16 %v320
    %v647 = vunpack.c.l.b16 %v321
    %v648 = vunpack.c.h.b16 %v321
    %v649 = vunpack.c.l.b16 %v322
    %v650 = vunpack.c.l.b16 %v323
    %v651 = vunpack.c.h.b16 %v323
    %v652 = vunpack.c.l.b16 %v324
    %v653 = vunpack.c.l.b16 %v325
    %v654 = vunpack.c.h.b16 %v325
    %v655 = vunpack.c.l.b16 %v326
    %v656 = vunpack.c.l.b16 %v327
    %v657 = vunpack.c.h.b16 %v327
    %v658 = vunpack.c.l.b16 %v328
    %v659 = vunpack.c.l.b16 %v329
    %v660 = vunpack.c.h.b16 %v329
    %v661 = vunpack.c.l.b16 %v330
    %v662 = vunpack.c.l.b16 %v331
    %v663 = vunpack.c.h.b16 %v331
    %v664 = vunpack.c.l.b16 %v332
    %v665 = vunpack.c.l.b16 %v333
    %v666 = vunpack.c.h.b16 %v333
    %v667 = vunpack.c.l.b16 %v334
    %v668 = vunpack.c.l.b16 %v335
    %v669 = vunpack.c.h.b16 %v335
    %v670 = vunpack.c.l.b16 %v336
    %v671 = vunpack.c.l.b16 %v337
    %v672 = vunpack.c.h.b16 %v337
    %v673 = vunpack.c.l.b16 %v338
    %v674 = vunpack.c.l.b16 %v339
    %v675 = vunpack.c.h.b16 %v339
    %v676 = vunpack.c.l.b16 %v340
    %v677 = vunpack.c.l.b16 %v341
    %v678 = vunpack.c.h.b16 %v341
    %v679 = vunpack.c.l.b16 %v342
    %v680 = vpack.c.b16 %v491, %v488
    %v681 = vpack.c.b16 %v492, %v489
    %v682 = vpack.c.b16 %v493, %v490
    %v683 = vpack.c.b16 %v497, %v494
    %v684 = vpack.c.b16 %v498, %v495
    %v685 = vpack.c.b16 %v499, %v496
    %v686 = vpack.c.b16 %v503, %v500
    %v687 = vpack.c.b16 %v504, %v501
    %v688 = vpack.c.b16 %v505, %v502
    %v689 = vpack.c.b16 %v509, %v506
    %v690 = vpack.c.b16 %v510, %v507
    %v691 = vpack.c.b16 %v511, %v508
    %v692 = vpack.c.b16 %v515, %v512
    %v693 = vpack.c.b16 %v516, %v513
    %v694 = vpack.c.b16 %v517, %v514
    %v695 = vpack.c.b16 %v521, %v518
    %v696 = vpack.c.b16 %v522, %v519
    %v697 = vpack.c.b16 %v523, %v520
    %v698 = vpack.c.b16 %v527, %v524
    %v699 = vpack.c.b16 %v528, %v525
    %v700 = vpack.c.b16 %v529, %v526
    %v701 = vpack.c.b16 %v533, %v530
    %v702 = vpack.c.b16 %v534, %v531
    %v703 = vpack.c.b16 %v535, %v532
    %v704 = vpack.c.b16 %v539, %v536
    %v705 = vpack.c.b16 %v540, %v537
    %v706 = vpack.c.b16 %v541, %v538
    %v707 = vpack.c.b16 %v545, %v542
    %v708 = vpack.c.b16 %v546, %v543
    %v709 = vpack.c.b16 %v547, %v544
    %v710 = vpack.c.b16 %v551, %v548
    %v711 = vpack.c.b16 %v552, %v549
    %v712 = vpack.c.b16 %v553, %v550
    %v713 = vpack.c.b16 %v557, %v554
    %v714 = vpack.c.b16 %v558, %v555
    %v715 = vpack.c.b16 %v559, %v556
    %v716 = vpack.c.b16 %v563, %v560
    %v717 = vpack.c.b16 %v564, %v561
    %v718 = vpack.c.b16 %v565, %v562
    %v719 = vpack.c.b16 %v569, %v566
    %v720 = vpack.c.b16 %v570, %v567
    %v721 = vpack.c.b16 %v571, %v568
    %v722 = vpack.c.b16 %v575, %v572
    %v723 = vpack.c.b16 %v576, %v573
    %v724 = vpack.c.b16 %v577, %v574
    %v725 = vpack.c.b16 %v581, %v578
    %v726 = vpack.c.b16 %v582, %v579
    %v727 = vpack.c.b16 %v583, %v580
    %v728 = vpack.c.b16 %v587, %v584
    %v729 = vpack.c.b16 %v588, %v585
    %v730 = vpack.c.b16 %v589, %v586
    %v731 = vpack.c.b16 %v593, %v590
    %v732 = vpack.c.b16 %v594, %v591
    %v733 = vpack.c.b16 %v595, %v592
    %v734 = vpack.c.b16 %v599, %v596
    %v735 = vpack.c.b16 %v600, %v597
    %v736 = vpack.c.b16 %v601, %v598
    %v737 = vpack.c.b16 %v605, %v602
    %v738 = vpack.c.b16 %v606, %v603
    %v739 = vpack.c.b16 %v607, %v604
    %v740 = vpack.c.b16 %v611, %v608
    %v741 = vpack.c.b16 %v612, %v609
    %v742 = vpack.c.b16 %v613, %v610
    %v743 = vpack.c.b16 %v617, %v614
    %v744 = vpack.c.b16 %v618, %v615
    %v745 = vpack.c.b16 %v619, %v616
    %v746 = vpack.c.b16 %v623, %v620
    %v747 = vpack.c.b16 %v624, %v621
    %v748 = vpack.c.b16 %v625, %v622
    %v749 = vpack.c.b16 %v629, %v626
    %v750 = vpack.c.b16 %v630, %v627
    %v751 = vpack.c.b16 %v631, %v628
    %v752 = vpack.c.b16 %v635, %v632
    %v753 = vpack.c.b16 %v636, %v633
    %v754 = vpack.c.b16 %v637, %v634
    %v755 = vpack.c.b16 %v641, %v638
    %v756 = vpack.c.b16 %v642, %v639
    %v757 = vpack.c.b16 %v643, %v640
    %v758 = vpack.c.b16 %v647, %v644
    %v759 = vpack.c.b16 %v648, %v645
    %v760 = vpack.c.b16 %v649, %v646
    %v761 = vpack.c.b16 %v653, %v650
    %v762 = vpack.c.b16 %v654, %v651
    %v763 = vpack.c.b16 %v655, %v652
    %v764 = vpack.c.b16 %v659, %v656
    %v765 = vpack.c.b16 %v660, %v657
    %v766 = vpack.c.b16 %v661, %v658
    %v767 = vpack.c.b16 %v665, %v662
    %v768 = vpack.c.b16 %v666, %v663
    %v769 = vpack.c.b16 %v667, %v664
    %v770 = vpack.c.b16 %v671, %v668
    %v771 = vpack.c.b16 %v672, %v669
    %v772 = vpack.c.b16 %v673, %v670
    %v773 = vpack.c.b16 %v677, %v674
    %v774 = vpack.c.b16 %v678, %v675
    %v775 = vpack.c.b16 %v679, %v676
    %872 = vmatprep.subr.bf16.mxu0 %v681
    %873 = vmatpush1.bf16.msra.mxu0 %v680
    %874 = vmatprep.subr.bf16.mxu0 %v684
    %875 = vmatpush1.bf16.msra.mxu0 %v683
    %876 = vmatprep.subr.bf16.mxu0 %v687
    %877 = vmatpush1.bf16.msra.mxu0 %v686
    %878 = vmatprep.subr.bf16.mxu0 %v690
    %879 = vmatpush1.bf16.msra.mxu0 %v689
    %880 = vmatprep.subr.bf16.mxu0 %v693
    %881 = vmatpush1.bf16.msra.mxu0 %v692
    %882 = vmatprep.subr.bf16.mxu0 %v696
    %883 = vmatpush1.bf16.msra.mxu0 %v695
    %884 = vmatprep.subr.bf16.mxu0 %v699
    %885 = vmatpush1.bf16.msra.mxu0 %v698
    %886 = vmatprep.subr.bf16.mxu0 %v702
    %887 = vmatpush1.bf16.msra.mxu0 %v701
    %888 = vmatprep.subr.bf16.mxu0 %v705
    %889 = vmatpush1.bf16.msra.mxu0 %v704
    %890 = vmatprep.subr.bf16.mxu0 %v708
    %891 = vmatpush1.bf16.msra.mxu0 %v707
    %892 = vmatprep.subr.bf16.mxu0 %v711
    %893 = vmatpush1.bf16.msra.mxu0 %v710
    %894 = vmatprep.subr.bf16.mxu0 %v714
    %895 = vmatpush1.bf16.msra.mxu0 %v713
    %896 = vmatprep.subr.bf16.mxu0 %v717
    %897 = vmatpush1.bf16.msra.mxu0 %v716
    %898 = vmatprep.subr.bf16.mxu0 %v720
    %899 = vmatpush1.bf16.msra.mxu0 %v719
    %900 = vmatprep.subr.bf16.mxu0 %v723
    %901 = vmatpush1.bf16.msra.mxu0 %v722
    %902 = vmatprep.subr.bf16.mxu0 %v726
    %903 = vmatpush1.bf16.msra.mxu0 %v725
    %904 = vmatprep.mubr.bf16.mxu0 %v212
    %905 = vmatmul.mubr.bf16.gmra.mrb[0].mxu0 %v211
    %v906 = vpop.f32.mrb[0].mxu0
    %v907 = vadd.f32 %v348, %v906
    %v908 = vpop.f32.mrb[0].mxu0
    %v909 = vadd.f32 %v352, %v908
    %v910 = vpop.f32.mrb[0].mxu0
    %v911 = vpop.f32.mrb[0].mxu0
    %912 = vdwg.mxu0
    %913 = vmatprep.subr.bf16.mxu0 %v729
    %914 = vmatpush1.bf16.msra.mxu0 %v728
    %915 = vmatprep.subr.bf16.mxu0 %v732
    %916 = vmatpush1.bf16.msra.mxu0 %v731
    %917 = vmatprep.subr.bf16.mxu0 %v735
    %918 = vmatpush1.bf16.msra.mxu0 %v734
    %919 = vmatprep.subr.bf16.mxu0 %v738
    %920 = vmatpush1.bf16.msra.mxu0 %v737
    %921 = vmatprep.subr.bf16.mxu0 %v741
    %922 = vmatpush1.bf16.msra.mxu0 %v740
    %923 = vmatprep.subr.bf16.mxu0 %v744
    %924 = vmatpush1.bf16.msra.mxu0 %v743
    %925 = vmatprep.subr.bf16.mxu0 %v747
    %926 = vmatpush1.bf16.msra.mxu0 %v746
    %927 = vmatprep.subr.bf16.mxu0 %v750
    %928 = vmatpush1.bf16.msra.mxu0 %v749
    %929 = vmatprep.subr.bf16.mxu0 %v753
    %930 = vmatpush1.bf16.msra.mxu0 %v752
    %931 = vmatprep.subr.bf16.mxu0 %v756
    %932 = vmatpush1.bf16.msra.mxu0 %v755
    %933 = vmatprep.subr.bf16.mxu0 %v759
    %934 = vmatpush1.bf16.msra.mxu0 %v758
    %935 = vmatprep.subr.bf16.mxu0 %v762
    %936 = vmatpush1.bf16.msra.mxu0 %v761
    %937 = vmatprep.subr.bf16.mxu0 %v765
    %938 = vmatpush1.bf16.msra.mxu0 %v764
    %939 = vmatprep.subr.bf16.mxu0 %v768
    %940 = vmatpush1.bf16.msra.mxu0 %v767
    %941 = vmatprep.subr.bf16.mxu0 %v771
    %942 = vmatpush1.bf16.msra.mxu0 %v770
    %943 = vmatprep.subr.bf16.mxu0 %v774
    %944 = vmatpush1.bf16.msra.mxu0 %v773
    %945 = vmatprep.mubr.bf16.mxu0 %v214
    %946 = vmatmul.mubr.bf16.gmra.mrb[0].mxu0 %v213
    %v947 = vpop.f32.mrb[0].mxu0
    %v948 = vadd.f32 %v907, %v947
    %v949 = vpop.f32.mrb[0].mxu0
    %v950 = vadd.f32 %v909, %v949
    %v951 = vpop.f32.mrb[0].mxu0
    %v952 = vpop.f32.mrb[0].mxu0
    %953 = vdwg.mxu0
    %954 = vmatprep.subr.bf16.mxu0 0
    %955 = vmatpush1.bf16.msra.mxu0 %v682
    %956 = vmatprep.subr.bf16.mxu0 0
    %957 = vmatpush1.bf16.msra.mxu0 %v685
    %958 = vmatprep.subr.bf16.mxu0 0
    %959 = vmatpush1.bf16.msra.mxu0 %v688
    %960 = vmatprep.subr.bf16.mxu0 0
    %961 = vmatpush1.bf16.msra.mxu0 %v691
    %962 = vmatprep.subr.bf16.mxu0 0
    %963 = vmatpush1.bf16.msra.mxu0 %v694
    %964 = vmatprep.subr.bf16.mxu0 0
    %965 = vmatpush1.bf16.msra.mxu0 %v697
    %966 = vmatprep.subr.bf16.mxu0 0
    %967 = vmatpush1.bf16.msra.mxu0 %v700
    %968 = vmatprep.subr.bf16.mxu0 0
    %969 = vmatpush1.bf16.msra.mxu0 %v703
    %970 = vmatprep.subr.bf16.mxu0 0
    %971 = vmatpush1.bf16.msra.mxu0 %v706
    %972 = vmatprep.subr.bf16.mxu0 0
    %973 = vmatpush1.bf16.msra.mxu0 %v709
    %974 = vmatprep.subr.bf16.mxu0 0
    %975 = vmatpush1.bf16.msra.mxu0 %v712
    %976 = vmatprep.subr.bf16.mxu0 0
    %977 = vmatpush1.bf16.msra.mxu0 %v715
    %978 = vmatprep.subr.bf16.mxu0 0
    %979 = vmatpush1.bf16.msra.mxu0 %v718
    %980 = vmatprep.subr.bf16.mxu0 0
    %981 = vmatpush1.bf16.msra.mxu0 %v721
    %982 = vmatprep.subr.bf16.mxu0 0
    %983 = vmatpush1.bf16.msra.mxu0 %v724
    %984 = vmatprep.subr.bf16.mxu0 0
    %985 = vmatpush1.bf16.msra.mxu0 %v727
    %986 = vmatprep.mubr.bf16.mxu0 %v212
    %987 = vmatmul.mubr.bf16.gmra.mrb[0].mxu0 %v211
    %v988 = vpop.f32.mrb[0].mxu0
    %v989 = vadd.f32 %v356, %v988
    %v990 = vpop.f32.mrb[0].mxu0
    %v991 = vpop.f32.mrb[0].mxu0
    %v992 = vpop.f32.mrb[0].mxu0
    %993 = vdwg.mxu0
    %994 = vmatprep.subr.bf16.mxu0 0
    %995 = vmatpush1.bf16.msra.mxu0 %v730
    %996 = vmatprep.subr.bf16.mxu0 0
    %997 = vmatpush1.bf16.msra.mxu0 %v733
    %998 = vmatprep.subr.bf16.mxu0 0
    %999 = vmatpush1.bf16.msra.mxu0 %v736
    %1000 = vmatprep.subr.bf16.mxu0 0
    %1001 = vmatpush1.bf16.msra.mxu0 %v739
    %1002 = vmatprep.subr.bf16.mxu0 0
    %1003 = vmatpush1.bf16.msra.mxu0 %v742
    %1004 = vmatprep.subr.bf16.mxu0 0
    %1005 = vmatpush1.bf16.msra.mxu0 %v745
    %1006 = vmatprep.subr.bf16.mxu0 0
    %1007 = vmatpush1.bf16.msra.mxu0 %v748
    %1008 = vmatprep.subr.bf16.mxu0 0
    %1009 = vmatpush1.bf16.msra.mxu0 %v751
    %1010 = vmatprep.subr.bf16.mxu0 0
    %1011 = vmatpush1.bf16.msra.mxu0 %v754
    %1012 = vmatprep.subr.bf16.mxu0 0
    %1013 = vmatpush1.bf16.msra.mxu0 %v757
    %1014 = vmatprep.subr.bf16.mxu0 0
    %1015 = vmatpush1.bf16.msra.mxu0 %v760
    %1016 = vmatprep.subr.bf16.mxu0 0
    %1017 = vmatpush1.bf16.msra.mxu0 %v763
    %1018 = vmatprep.subr.bf16.mxu0 0
    %1019 = vmatpush1.bf16.msra.mxu0 %v766
    %1020 = vmatprep.subr.bf16.mxu0 0
    %1021 = vmatpush1.bf16.msra.mxu0 %v769
    %1022 = vmatprep.subr.bf16.mxu0 0
    %1023 = vmatpush1.bf16.msra.mxu0 %v772
    %1024 = vmatprep.subr.bf16.mxu0 0
    %1025 = vmatpush1.bf16.msra.mxu0 %v775
    %1026 = vmatprep.mubr.bf16.mxu0 %v214
    %1027 = vmatmul.mubr.bf16.gmra.mrb[0].mxu0 %v213
    %v1028 = vpop.f32.mrb[0].mxu0
    %v1029 = vadd.f32 %v989, %v1028
    %v1030 = vpop.f32.mrb[0].mxu0
    %v1031 = vpop.f32.mrb[0].mxu0
    %v1032 = vpop.f32.mrb[0].mxu0
    %1033 = vdwg.mxu0
    %v1034 = vmax.f32 %v948, 0.0
    %v1035 = vmax.f32 %v950, 0.0
    %v1036 = vmax.f32 %v1029, 0.0
    %v1037 = vpack.c.bf16 %v1034, %v1034
    %v1038 = vpack.c.bf16 %v1035, %v1035
    %v1039 = vpack.c.bf16 %v1036, %v1036
    %v1040 = vld [vmem:[%s5] sm:$0xff]
    %v1041 = vld [vmem:[%s5 + $0x8] sm:$0xf]
    %v1044 = vunpack.c.l.b16 %v1040
    %v1045 = vunpack.c.h.b16 %v1040
    %v1046 = vunpack.c.l.b16 %v1041
    %v1047 = vpack.c.b16 %v1044, %v1044
    %v1048 = vpack.c.b16 %v1045, %v1045
    %v1049 = vpack.c.b16 %v1046, %v1046
    %1053 = vmatprep.subr.bf16.mxu0 %v1038
    %1054 = vmatpush1.bf16.xpose.msra.mxu0 %v1037
    %1055 = vmatprep.subr.bf16.mxu0 0
    %1056 = vmatpush1.bf16.xpose.msra.mxu0 0
    %1057 = vmatprep.subr.bf16.mxu0 0
    %1058 = vmatpush1.bf16.xpose.msra.mxu0 0
    %1059 = vmatprep.subr.bf16.mxu0 0
    %1060 = vmatpush1.bf16.xpose.msra.mxu0 0
    %1061 = vmatprep.subr.bf16.mxu0 0
    %1062 = vmatpush1.bf16.xpose.msra.mxu0 0
    %1063 = vmatprep.subr.bf16.mxu0 0
    %1064 = vmatpush1.bf16.xpose.msra.mxu0 0
    %1065 = vmatprep.subr.bf16.mxu0 0
    %1066 = vmatpush1.bf16.xpose.msra.mxu0 0
    %1067 = vmatprep.subr.bf16.mxu0 0
    %1068 = vmatpush1.bf16.xpose.msra.mxu0 0
    %1069 = vmatprep.subr.bf16.mxu0 0
    %1070 = vmatpush1.bf16.xpose.msra.mxu0 0
    %1071 = vmatprep.subr.bf16.mxu0 0
    %1072 = vmatpush1.bf16.xpose.msra.mxu0 0
    %1073 = vmatprep.subr.bf16.mxu0 0
    %1074 = vmatpush1.bf16.xpose.msra.mxu0 0
    %1075 = vmatprep.subr.bf16.mxu0 0
    %1076 = vmatpush1.bf16.xpose.msra.mxu0 0
    %1077 = vmatprep.subr.bf16.mxu0 0
    %1078 = vmatpush1.bf16.xpose.msra.mxu0 0
    %1079 = vmatprep.subr.bf16.mxu0 0
    %1080 = vmatpush1.bf16.xpose.msra.mxu0 0
    %1081 = vmatprep.subr.bf16.mxu0 0
    %1082 = vmatpush1.bf16.xpose.msra.mxu0 0
    %1083 = vmatprep.subr.bf16.mxu0 0
    %1084 = vmatpush1.bf16.xpose.msra.mxu0 0
    %1085 = vmatprep.mubr.bf16.mxu0 %v1048
    %1086 = vmatmul.mubr.bf16.gmra.mrb[0].mxu0 %v1047
    %v1087 = vpop.f32.mrb[0].mxu0
    %v1088 = vadd.f32 0.0, %v1087
    %v1089 = vpop.f32.mrb[0].mxu0
    %v1090 = vpop.f32.mrb[0].mxu0
    %v1091 = vpop.f32.mrb[0].mxu0
    %1092 = vdwg.mxu0
    %1093 = vmatprep.subr.bf16.mxu0 0
    %1094 = vmatpush1.bf16.xpose.msra.mxu0 %v1039
    %1095 = vmatprep.subr.bf16.mxu0 0
    %1096 = vmatpush1.bf16.xpose.msra.mxu0 0
    %1097 = vmatprep.subr.bf16.mxu0 0
    %1098 = vmatpush1.bf16.xpose.msra.mxu0 0
    %1099 = vmatprep.subr.bf16.mxu0 0
    %1100 = vmatpush1.bf16.xpose.msra.mxu0 0
    %1101 = vmatprep.subr.bf16.mxu0 0
    %1102 = vmatpush1.bf16.xpose.msra.mxu0 0
    %1103 = vmatprep.subr.bf16.mxu0 0
    %1104 = vmatpush1.bf16.xpose.msra.mxu0 0
    %1105 = vmatprep.subr.bf16.mxu0 0
    %1106 = vmatpush1.bf16.xpose.msra.mxu0 0
    %1107 = vmatprep.subr.bf16.mxu0 0
    %1108 = vmatpush1.bf16.xpose.msra.mxu0 0
    %1109 = vmatprep.subr.bf16.mxu0 0
    %1110 = vmatpush1.bf16.xpose.msra.mxu0 0
    %1111 = vmatprep.subr.bf16.mxu0 0
    %1112 = vmatpush1.bf16.xpose.msra.mxu0 0
    %1113 = vmatprep.subr.bf16.mxu0 0
    %1114 = vmatpush1.bf16.xpose.msra.mxu0 0
    %1115 = vmatprep.subr.bf16.mxu0 0
    %1116 = vmatpush1.bf16.xpose.msra.mxu0 0
    %1117 = vmatprep.subr.bf16.mxu0 0
    %1118 = vmatpush1.bf16.xpose.msra.mxu0 0
    %1119 = vmatprep.subr.bf16.mxu0 0
    %1120 = vmatpush1.bf16.xpose.msra.mxu0 0
    %1121 = vmatprep.subr.bf16.mxu0 0
    %1122 = vmatpush1.bf16.xpose.msra.mxu0 0
    %1123 = vmatprep.subr.bf16.mxu0 0
    %1124 = vmatpush1.bf16.xpose.msra.mxu0 0
    %1125 = vmatprep.mubr.bf16.mxu0 0
    %1126 = vmatmul.mubr.bf16.gmra.mrb[0].mxu0 %v1049
    %v1127 = vpop.f32.mrb[0].mxu0
    %v1128 = vadd.f32 %v1088, %v1127
    %v1129 = vpop.f32.mrb[0].mxu0
    %v1130 = vpop.f32.mrb[0].mxu0
    %v1131 = vpop.f32.mrb[0].mxu0
    %1132 = vdwg.mxu0
    %s1133 = sld [smem:[#allocation2]]
    %v1134 = vstv %s1133
    %v1135 = vadd.f32 %v1128, %v1134
    %vm1136 = vcmask 8192
    %1137 = vst.msk [vmem:[#allocation9] sm:$0x1] %vm1136, %v1135
    // Predicated region
    $region42: #{tpu_custom_call.1} parent=1 // pred_check
      _
    $region43: #{tpu_custom_call.1} parent=1 // pred_check_branch
      %1139 = sbr.rel (0) target = $region45
    $region44: #{tpu_custom_call.1} parent=1 // pred_region
      %s1141 = ssub.s32 16, 16
      %1142 = vsyncadd [#allocation5], %s1141
      %s1144 = sshll.u32 [#allocation9], 4
      %s1145 = int_to_ptr.vmem [resolvable:$true] %s1144
      %1147 = dma.vmem_to_hbm [thread:$0]  %s1145, 16, %s7, [#allocation5]
    $region45: #{tpu_custom_call.1} parent=1 // pred_fallthru
      _
    // Predicated region
    $region46: #{tpu_custom_call.1} parent=1 // pred_check
      _
    $region47: #{tpu_custom_call.1} parent=1 // pred_check_branch
      %1149 = sbr.rel (0) target = $region49
    $region48: #{tpu_custom_call.1} parent=1 // pred_region
      %1150 = dma.done [#allocation5], 16
    $region49: #{tpu_custom_call.1} parent=1 // pred_fallthru
      _
    %1151 = vsyncpa [#allocation4], 1
    %1152 = vsyncpa [#allocation7], 1
    %1153 = vsyncpa [#allocation5], 1

</llo_original>
